<compile_context>
chip_gen: v5e
topology: v5e:2x2
jax: 0.10.0
libtpu: 0.0.40
codegen_flags: <defaults>
</compile_context>

<pallas_src>
import jax
import jax.numpy as jnp
from jax.experimental import pallas as pl
from jax.experimental.pallas import tpu as pltpu

# ----------------------------- config ---------------------------------------
B = 2              # batch
N = 8              # sequence length
DIM = 32           # model dim
HEADS = 4          # attention heads
DIM_HEAD = 16      # per-head dim
INNER = HEADS * DIM_HEAD
BN = B * N         # flattened (batch, seq) rows used for the projections
HB = HEADS * B     # flattened (head, batch) axis used for the attention stage
ATTN_SCALE = 8.0   # `scale` arg of the module
LN_EPS = 1e-5      # F.layer_norm default eps
L2_EPS = 1e-12     # F.normalize default eps


def attention_kernel(x_ref, wqkv_ref, qk_scale_ref, wout_ref, o_ref):
    # ---- LayerNorm (gamma folded into the projection weights, beta == 0) ----
    x = x_ref[...].astype(jnp.float32)                        # (BN, DIM)
    mu = jnp.mean(x, axis=-1, keepdims=True)
    var = jnp.mean((x - mu) ** 2, axis=-1, keepdims=True)
    xn = (x - mu) * jax.lax.rsqrt(var + LN_EPS)               # (BN, DIM)

    # Heads-major broadcast (major-axis copy, no relayout), bf16 MXU operands.
    xh = jnp.broadcast_to(xn.astype(jnp.bfloat16)[None], (HEADS, BN, DIM))

    # ---- fused Q/K/V projection: ONE batched matmul, z = HEADS, M = B*N ----
    qkv = jnp.einsum('znd,zdf->znf', xh, wqkv_ref[...],
                     preferred_element_type=jnp.float32)      # (H, BN, 3F)
    q = qkv[..., :DIM_HEAD]
    k = qkv[..., DIM_HEAD:2 * DIM_HEAD]
    v = qkv[..., 2 * DIM_HEAD:]

    # ---- per-row l2 normalization (F.normalize, p=2, dim=-1) ----
    def l2norm(t):
        ss = jnp.sum(t * t, axis=-1, keepdims=True)
        # t / max(||t||, eps) == t * rsqrt(max(||t||^2, eps^2))
        return t * jax.lax.rsqrt(jnp.maximum(ss, L2_EPS * L2_EPS))

    q = l2norm(q) * qk_scale_ref[...]   # q_scale*k_scale*ATTN_SCALE folded in
    k = l2norm(k)

    # ---- attention is per (head, batch): re-split B*N -> (B, N) rows ----
    qz = q.reshape(HB, N, DIM_HEAD).astype(jnp.bfloat16)
    kz = k.reshape(HB, N, DIM_HEAD).astype(jnp.bfloat16)
    vz = v.reshape(HB, N, DIM_HEAD).astype(jnp.bfloat16)

    sim = jnp.einsum('zif,zjf->zij', qz, kz,
                     preferred_element_type=jnp.float32)      # (HB, N, N)
    # Logits bounded by max|q_scale*k_scale|*ATTN_SCALE -> exp is safe in f32,
    # no max-subtraction / extra XLU row-max reduce needed.
    p = jnp.exp(sim)
    attn = p * pl.reciprocal(jnp.sum(p, axis=-1, keepdims=True), approx=True)
    # attn_dropout has p = 0.0 -> identity.

    out = jnp.einsum('zij,zjf->zif', attn.astype(jnp.bfloat16), vz,
                     preferred_element_type=jnp.float32)      # (HB, N, F)

    # ---- output projection: per-head partial projection, then sum heads ----
    # (equivalent to concat-over-heads followed by (BN, INNER) @ (INNER, DIM))
    out_h = out.reshape(HEADS, BN, DIM_HEAD).astype(jnp.bfloat16)
    oz = jnp.einsum('znf,zfD->znD', out_h, wout_ref[...],
                    preferred_element_type=jnp.float32)       # (H, BN, DIM)
    o_ref[...] = jnp.sum(oz, axis=0).astype(o_ref.dtype)      # (BN, DIM)


def attention_forward(x, gamma, wq, wkv, q_scale, k_scale, wout):
    # --- wrapper-side (pure JAX, one-time) parameter re-layout / folding ---
    # Fold LayerNorm gamma (beta == 0) into the projection weights.
    wq_g = gamma[:, None] * wq                       # (DIM, INNER)
    wk_g = gamma[:, None] * wkv[:, :INNER]           # (DIM, INNER)
    wv_g = gamma[:, None] * wkv[:, INNER:]           # (DIM, INNER)

    def per_head(w):                                 # (DIM, H*F) -> (H, DIM, F)
        return w.reshape(DIM, HEADS, DIM_HEAD).transpose(1, 0, 2)

    # Fused per-head QKV weight; bf16 operands (f32 accumulate in-kernel).
    wqkv = jnp.concatenate(
        [per_head(wq_g), per_head(wk_g), per_head(wv_g)],
        axis=-1).astype(jnp.bfloat16)                          # (H, DIM, 3F)
    wout_h = wout.reshape(HEADS, DIM_HEAD, DIM).astype(jnp.bfloat16)  # (H, F, DIM)

    # q_scale / k_scale / cosine-sim scale only ever enter as an elementwise
    # factor of the q.k contraction -> fold all three into one vector on q.
    qk_scale = (q_scale * k_scale * ATTN_SCALE).reshape(1, DIM_HEAD).astype(
        jnp.float32)

    x2 = x.reshape(BN, DIM)

    flops = (2 * HEADS * BN * DIM * 3 * DIM_HEAD        # fused QKV projection
             + 2 * HB * N * N * DIM_HEAD * 2            # sim + attn@v
             + 2 * HEADS * BN * DIM_HEAD * DIM)         # output projection
    transcendentals = HB * N * N + 2 * HEADS * BN + BN + HB * N   # exp + rsqrt/recip
    bytes_accessed = (x2.size * 4 + wqkv.size * 2 + qk_scale.size * 4
                      + wout_h.size * 2 + BN * DIM * 4)

    vmem = lambda: pl.BlockSpec(memory_space=pltpu.MemorySpace.VMEM)

    # No grid: a single invocation, every operand fully resident in VMEM.
    out2 = pl.pallas_call(
        attention_kernel,
        out_shape=jax.ShapeDtypeStruct((BN, DIM), x.dtype),
        in_specs=[vmem() for _ in range(4)],
        out_specs=vmem(),
        cost_estimate=pl.CostEstimate(flops=int(flops),
                                      transcendentals=int(transcendentals),
                                      bytes_accessed=int(bytes_accessed)),
    )(x2, wqkv, qk_scale, wout_h)
    return out2.reshape(B, N, DIM)


# ----------------------------- pure-JAX reference ----------------------------
def attention_reference(x, gamma, wq, wkv, q_scale, k_scale, wout):
    xf = x.astype(jnp.float32)
    mu = jnp.mean(xf, axis=-1, keepdims=True)
    var = jnp.mean((xf - mu) ** 2, axis=-1, keepdims=True)
    xn = (xf - mu) / jnp.sqrt(var + LN_EPS) * gamma

    q = xn @ wq
    kv = xn @ wkv
    k, v = kv[..., :INNER], kv[..., INNER:]

    def split_heads(t):
        return t.reshape(B, N, HEADS, DIM_HEAD).transpose(0, 2, 1, 3)

    def l2n(t):
        nrm = jnp.sqrt(jnp.sum(t * t, axis=-1, keepdims=True))
        return t / jnp.maximum(nrm, L2_EPS)

    q, k, v = map(split_heads, (q, k, v))
    q = l2n(q) * q_scale
    k = l2n(k) * k_scale
    sim = jnp.einsum('bhid,bhjd->bhij', q, k) * ATTN_SCALE
    attn = jax.nn.softmax(sim, axis=-1)
    out = jnp.einsum('bhij,bhjd->bhid', attn, v)
    out = out.transpose(0, 2, 1, 3).reshape(B, N, INNER)
    return out @ wout


if __name__ == "__main__":
    key = jax.random.PRNGKey(0)
    kx, kq, kkv, ko, kg, kqs, kks = jax.random.split(key, 7)

    x = jax.random.normal(kx, (B, N, DIM), dtype=jnp.float32)

    # Deterministic parameters (shapes follow the module's __init__); gamma and
    # the q/k scales are perturbed away from their all-ones init so the
    # wrapper-side gamma / scale folding is actually exercised by the check.
    gamma = 1.0 + 0.1 * jax.random.normal(kg, (DIM,), jnp.float32)
    wq = jax.random.normal(kq, (DIM, INNER), jnp.float32) * 0.05        # to_q
    wkv = jax.random.normal(kkv, (DIM, 2 * INNER), jnp.float32) * 0.05  # to_kv
    q_scale = 1.0 + 0.1 * jax.random.normal(kqs, (DIM_HEAD,), jnp.float32)
    k_scale = 1.0 + 0.1 * jax.random.normal(kks, (DIM_HEAD,), jnp.float32)
    wout = jax.random.normal(ko, (INNER, DIM), jnp.float32) * 0.05      # to_out

    out = attention_forward(x, gamma, wq, wkv, q_scale, k_scale, wout)
    out = jax.block_until_ready(out)

    ref = attention_reference(x, gamma, wq, wkv, q_scale, k_scale, wout)
    assert out.shape == (B, N, DIM)
    err = jnp.max(jnp.abs(out - ref))
    # Tolerance covers bf16 matmul operands (f32 accumulate) and the EUP
    # approximate reciprocal in the softmax denominator; the pure-f32 reference
    # matches to ~1e-3 in practice.
    assert jnp.allclose(out, ref, atol=2e-2, rtol=2e-2), f"max abs err {err}"

    print("KERNEL_OK")
</pallas_src>

<mosaic_0001>
module attributes {stable_mosaic.version = 11 : i64} {
  func.func @attention_kernel(%arg0: memref<16x32xf32, #tpu.memory_space<vmem>>, %arg1: memref<4x32x48xbf16, #tpu.memory_space<vmem>>, %arg2: memref<1x16xf32, #tpu.memory_space<vmem>>, %arg3: memref<4x16x32xbf16, #tpu.memory_space<vmem>>, %arg4: memref<16x32xf32, #tpu.memory_space<vmem>>) attributes {dimension_semantics = [], scalar_prefetch = 0 : i64, scratch_operands = 0 : i64, tpu.core_type = #tpu.core_type<tc>} {
    %c0 = arith.constant 0 : index
    %c0_0 = arith.constant 0 : index
    %0 = vector.load %arg0[%c0, %c0_0] : memref<16x32xf32, #tpu.memory_space<vmem>>, vector<16x32xf32>
    %cst = arith.constant dense<0.000000e+00> : vector<16xf32>
    %1 = vector.multi_reduction <add>, %0, %cst [1] : vector<16x32xf32> to vector<16xf32>
    %2 = vector.shape_cast %1 : vector<16xf32> to vector<16x1xf32>
    %cst_1 = arith.constant 3.200000e+01 : f32
    %3 = vector.broadcast %cst_1 : f32 to vector<16x1xf32>
    %4 = arith.divf %2, %3 : vector<16x1xf32>
    %5 = vector.broadcast %4 : vector<16x1xf32> to vector<16x32xf32>
    %6 = arith.subf %0, %5 : vector<16x32xf32>
    %7 = arith.mulf %6, %6 : vector<16x32xf32>
    %cst_2 = arith.constant dense<0.000000e+00> : vector<16xf32>
    %8 = vector.multi_reduction <add>, %7, %cst_2 [1] : vector<16x32xf32> to vector<16xf32>
    %9 = vector.shape_cast %8 : vector<16xf32> to vector<16x1xf32>
    %cst_3 = arith.constant 3.200000e+01 : f32
    %10 = vector.broadcast %cst_3 : f32 to vector<16x1xf32>
    %11 = arith.divf %9, %10 : vector<16x1xf32>
    %12 = vector.broadcast %4 : vector<16x1xf32> to vector<16x32xf32>
    %13 = arith.subf %0, %12 : vector<16x32xf32>
    %cst_4 = arith.constant 9.99999974E-6 : f32
    %14 = vector.broadcast %cst_4 : f32 to vector<16x1xf32>
    %15 = arith.addf %11, %14 : vector<16x1xf32>
    %16 = math.rsqrt %15 : vector<16x1xf32>
    %17 = vector.broadcast %16 : vector<16x1xf32> to vector<16x32xf32>
    %18 = arith.mulf %13, %17 : vector<16x32xf32>
    %19 = arith.truncf %18 : vector<16x32xf32> to vector<16x32xbf16>
    %20 = vector.shape_cast %19 : vector<16x32xbf16> to vector<1x16x32xbf16>
    %21 = vector.shape_cast %20 : vector<1x16x32xbf16> to vector<1x16x32xbf16>
    %22 = vector.broadcast %21 : vector<1x16x32xbf16> to vector<4x16x32xbf16>
    %c0_5 = arith.constant 0 : index
    %c0_6 = arith.constant 0 : index
    %c0_7 = arith.constant 0 : index
    %23 = vector.load %arg1[%c0_5, %c0_6, %c0_7] : memref<4x32x48xbf16, #tpu.memory_space<vmem>>, vector<4x32x48xbf16>
    "tpu.trace_start"() <{level = 10 : i32, message = "znd,zdf->znf"}> : () -> ()
    %cst_8 = arith.constant dense<0.000000e+00> : vector<4x16x48xf32>
    %24 = tpu.matmul %22, %23, %cst_8 {dimension_numbers = #tpu.dot_dimension_numbers<[2], [1], [1], [2], [0, 0, 0, 1, 1, 2], [0], [0]>} : vector<4x16x32xbf16>, vector<4x32x48xbf16>, vector<4x16x48xf32> -> vector<4x16x48xf32>
    "tpu.trace_stop"() : () -> ()
    %25 = vector.extract_strided_slice %24 {offsets = [0, 0, 0], sizes = [4, 16, 16], strides = [1, 1, 1]} : vector<4x16x48xf32> to vector<4x16x16xf32>
    %26 = vector.extract_strided_slice %24 {offsets = [0, 0, 16], sizes = [4, 16, 16], strides = [1, 1, 1]} : vector<4x16x48xf32> to vector<4x16x16xf32>
    %27 = vector.extract_strided_slice %24 {offsets = [0, 0, 32], sizes = [4, 16, 16], strides = [1, 1, 1]} : vector<4x16x48xf32> to vector<4x16x16xf32>
    %28 = arith.mulf %25, %25 : vector<4x16x16xf32>
    %cst_9 = arith.constant dense<0.000000e+00> : vector<4x16xf32>
    %29 = vector.multi_reduction <add>, %28, %cst_9 [2] : vector<4x16x16xf32> to vector<4x16xf32>
    %30 = vector.shape_cast %29 : vector<4x16xf32> to vector<4x16x1xf32>
    %cst_10 = arith.constant 1.000000e-24 : f32
    %31 = vector.broadcast %cst_10 : f32 to vector<4x16x1xf32>
    %32 = arith.maximumf %30, %31 : vector<4x16x1xf32>
    %33 = math.rsqrt %32 : vector<4x16x1xf32>
    %34 = vector.broadcast %33 : vector<4x16x1xf32> to vector<4x16x16xf32>
    %35 = arith.mulf %25, %34 : vector<4x16x16xf32>
    %c0_11 = arith.constant 0 : index
    %c0_12 = arith.constant 0 : index
    %36 = vector.load %arg2[%c0_11, %c0_12] : memref<1x16xf32, #tpu.memory_space<vmem>>, vector<1x16xf32>
    %37 = vector.shape_cast %36 : vector<1x16xf32> to vector<1x1x16xf32>
    %38 = vector.broadcast %37 : vector<1x1x16xf32> to vector<4x16x16xf32>
    %39 = arith.mulf %35, %38 : vector<4x16x16xf32>
    %40 = arith.mulf %26, %26 : vector<4x16x16xf32>
    %cst_13 = arith.constant dense<0.000000e+00> : vector<4x16xf32>
    %41 = vector.multi_reduction <add>, %40, %cst_13 [2] : vector<4x16x16xf32> to vector<4x16xf32>
    %42 = vector.shape_cast %41 : vector<4x16xf32> to vector<4x16x1xf32>
    %cst_14 = arith.constant 1.000000e-24 : f32
    %43 = vector.broadcast %cst_14 : f32 to vector<4x16x1xf32>
    %44 = arith.maximumf %42, %43 : vector<4x16x1xf32>
    %45 = math.rsqrt %44 : vector<4x16x1xf32>
    %46 = vector.broadcast %45 : vector<4x16x1xf32> to vector<4x16x16xf32>
    %47 = arith.mulf %26, %46 : vector<4x16x16xf32>
    %48 = vector.shape_cast %39 : vector<4x16x16xf32> to vector<8x8x16xf32>
    %49 = arith.truncf %48 : vector<8x8x16xf32> to vector<8x8x16xbf16>
    %50 = vector.shape_cast %47 : vector<4x16x16xf32> to vector<8x8x16xf32>
    %51 = arith.truncf %50 : vector<8x8x16xf32> to vector<8x8x16xbf16>
    %52 = vector.shape_cast %27 : vector<4x16x16xf32> to vector<8x8x16xf32>
    %53 = arith.truncf %52 : vector<8x8x16xf32> to vector<8x8x16xbf16>
    "tpu.trace_start"() <{level = 10 : i32, message = "zif,zjf->zij"}> : () -> ()
    %cst_15 = arith.constant dense<0.000000e+00> : vector<8x8x8xf32>
    %54 = tpu.matmul %49, %51, %cst_15 {dimension_numbers = #tpu.dot_dimension_numbers<[2], [2], [1], [1], [0, 0, 0, 1, 1, 1], [0], [0]>} : vector<8x8x16xbf16>, vector<8x8x16xbf16>, vector<8x8x8xf32> -> vector<8x8x8xf32>
    "tpu.trace_stop"() : () -> ()
    %55 = math.exp %54 : vector<8x8x8xf32>
    %cst_16 = arith.constant dense<0.000000e+00> : vector<8x8xf32>
    %56 = vector.multi_reduction <add>, %55, %cst_16 [2] : vector<8x8x8xf32> to vector<8x8xf32>
    %57 = vector.shape_cast %56 : vector<8x8xf32> to vector<8x8x1xf32>
    %58 = tpu.reciprocal %57 {approx = true} : vector<8x8x1xf32> -> vector<8x8x1xf32>
    %59 = vector.broadcast %58 : vector<8x8x1xf32> to vector<8x8x8xf32>
    %60 = arith.mulf %55, %59 : vector<8x8x8xf32>
    %61 = arith.truncf %60 : vector<8x8x8xf32> to vector<8x8x8xbf16>
    "tpu.trace_start"() <{level = 10 : i32, message = "zij,zjf->zif"}> : () -> ()
    %cst_17 = arith.constant dense<0.000000e+00> : vector<8x8x16xf32>
    %62 = tpu.matmul %61, %53, %cst_17 {dimension_numbers = #tpu.dot_dimension_numbers<[2], [1], [1], [2], [0, 0, 0, 1, 1, 2], [0], [0]>} : vector<8x8x8xbf16>, vector<8x8x16xbf16>, vector<8x8x16xf32> -> vector<8x8x16xf32>
    "tpu.trace_stop"() : () -> ()
    %63 = vector.shape_cast %62 : vector<8x8x16xf32> to vector<4x16x16xf32>
    %64 = arith.truncf %63 : vector<4x16x16xf32> to vector<4x16x16xbf16>
    %c0_18 = arith.constant 0 : index
    %c0_19 = arith.constant 0 : index
    %c0_20 = arith.constant 0 : index
    %65 = vector.load %arg3[%c0_18, %c0_19, %c0_20] : memref<4x16x32xbf16, #tpu.memory_space<vmem>>, vector<4x16x32xbf16>
    "tpu.trace_start"() <{level = 10 : i32, message = "znf,zfD->znD"}> : () -> ()
    %cst_21 = arith.constant dense<0.000000e+00> : vector<4x16x32xf32>
    %66 = tpu.matmul %64, %65, %cst_21 {dimension_numbers = #tpu.dot_dimension_numbers<[2], [1], [1], [2], [0, 0, 0, 1, 1, 2], [0], [0]>} : vector<4x16x16xbf16>, vector<4x16x32xbf16>, vector<4x16x32xf32> -> vector<4x16x32xf32>
    "tpu.trace_stop"() : () -> ()
    %cst_22 = arith.constant dense<0.000000e+00> : vector<16x32xf32>
    %67 = vector.multi_reduction <add>, %66, %cst_22 [0] : vector<4x16x32xf32> to vector<16x32xf32>
    %c0_23 = arith.constant 0 : index
    %c0_24 = arith.constant 0 : index
    %68 = vector.load %arg4[%c0_23, %c0_24] : memref<16x32xf32, #tpu.memory_space<vmem>>, vector<16x32xf32>
    tpu.vector_store %arg4[%c0_23, %c0_24], %67 {strides = array<i32>} : memref<16x32xf32, #tpu.memory_space<vmem>>, vector<16x32xf32>,
    return
  }
}

</mosaic_0001>

<llo_original>
// kernel: tpu_custom_call.1
$region0: #{tpu_custom_call.1}
  #allocation0 [shape = 'u32[]', space=smem, size = 0x4, offset = 0x4, fixed_abs, tag = 'smem constant byte address 0x4 - core index']
  #allocation1 [shape = 'u32[72,128]{1,0:T(1,128)}', space=vmem, size = 0x9000, scoped, tag = 'internal scratch']
  %s0 = inlined_call_operand.hbm [shape: f32[16,32], index: 0, kind: input, shape index: {}]
  %s1 = inlined_call_operand.hbm [shape: bf16[4,32,48], index: 1, kind: input, shape index: {}]
  %s2 = inlined_call_operand.vmem [shape: f32[1,16], index: 2, kind: input, shape index: {}]
  %s3 = inlined_call_operand.hbm [shape: bf16[4,16,32], index: 3, kind: input, shape index: {}]
  %s4 = inlined_call_operand.hbm [shape: f32[16,32], index: 4, kind: output, shape index: {}]
  %s5 = sld [smem:[#allocation0]]
  $region38: #{tpu_custom_call.1} parent=0
    _
  %s7 = ssub.s32 1, %s5
  %s8 = scalar_select 0, %s7, %s5
  $region1: #{tpu_custom_call.1} parent=0
    #allocation2 [shape = 'u8[8192]{0}', space=vmem, size = 0x2000, scoped, tag = 'input window, operand 0, single buffered']
    #allocation3 [shape = 's32[1]{0}', space=sflag, size = 0x4, scoped, tag = 'scoped memory for tpu_custom_call.1']
    #allocation4 [shape = 's32[1]{0}', space=sflag, size = 0x4, scoped, tag = 'scoped memory for tpu_custom_call.1']
    #allocation5 [shape = 'u8[32768]{0}', space=vmem, size = 0x8000, scoped, tag = 'input window, operand 1, single buffered']
    #allocation6 [shape = 's32[1]{0}', space=sflag, size = 0x4, scoped, tag = 'scoped memory for tpu_custom_call.1']
    #allocation7 [shape = 'u8[16384]{0}', space=vmem, size = 0x4000, scoped, tag = 'input window, operand 3, single buffered']
    #allocation8 [shape = 'u8[8192]{0}', space=vmem, size = 0x2000, scoped, tag = 'output window, operand 0, single buffered']
    %9 = vsyncpa [#allocation3], 0
    %10 = vsyncpa [#allocation6], 0
    %11 = vsyncpa [#allocation4], 0
    // Predicated region
    $region2: #{tpu_custom_call.1} parent=1 // pred_check
      _
    $region3: #{tpu_custom_call.1} parent=1 // pred_check_branch
      %13 = sbr.rel (0) target = $region5
    $region4: #{tpu_custom_call.1} parent=1 // pred_region
      %15 = vsyncadd [#allocation3], 0
      %s16 = sshll.u32 %s0, 4
      %s17 = int_to_ptr.hbm [resolvable:$true] %s16
      %s18 = sshll.u32 [#allocation2], 4
      %s19 = int_to_ptr.vmem [resolvable:$true] %s18
      %24 = dma.hbm_to_vmem [thread:$0]  %s17, 256, %s19, [#allocation3], 128, 128, 8
    $region5: #{tpu_custom_call.1} parent=1 // pred_fallthru
      _
    // Predicated region
    $region6: #{tpu_custom_call.1} parent=1 // pred_check
      _
    $region7: #{tpu_custom_call.1} parent=1 // pred_check_branch
      %26 = sbr.rel (0) target = $region9
    $region8: #{tpu_custom_call.1} parent=1 // pred_region
      %28 = vsyncadd [#allocation6], 0
      %s29 = sshll.u32 %s1, 4
      %s30 = int_to_ptr.hbm [resolvable:$true] %s29
      %s31 = sshll.u32 [#allocation5], 4
      %s32 = int_to_ptr.vmem [resolvable:$true] %s31
      %37 = dma.hbm_to_vmem [thread:$0]  %s30, 1024, %s32, [#allocation6], 64, 64, 4
    $region9: #{tpu_custom_call.1} parent=1 // pred_fallthru
      _
    // Predicated region
    $region10: #{tpu_custom_call.1} parent=1 // pred_check
      _
    $region11: #{tpu_custom_call.1} parent=1 // pred_check_branch
      %39 = sbr.rel (0) target = $region13
    $region12: #{tpu_custom_call.1} parent=1 // pred_region
      _
    $region13: #{tpu_custom_call.1} parent=1 // pred_fallthru
      _
    // Predicated region
    $region14: #{tpu_custom_call.1} parent=1 // pred_check
      _
    $region15: #{tpu_custom_call.1} parent=1 // pred_check_branch
      %41 = sbr.rel (0) target = $region17
    $region16: #{tpu_custom_call.1} parent=1 // pred_region
      %43 = vsyncadd [#allocation6], 0
      %s44 = sshll.u32 %s3, 4
      %s45 = int_to_ptr.hbm [resolvable:$true] %s44
      %s46 = sshll.u32 [#allocation7], 4
      %s47 = int_to_ptr.vmem [resolvable:$true] %s46
      %52 = dma.hbm_to_vmem [thread:$0]  %s45, 512, %s47, [#allocation6], 64, 64, 4
    $region17: #{tpu_custom_call.1} parent=1 // pred_fallthru
      _
    // Predicated region
    $region18: #{tpu_custom_call.1} parent=1 // pred_check
      _
    $region19: #{tpu_custom_call.1} parent=1 // pred_check_branch
      %54 = sbr.rel (0) target = $region21
    $region20: #{tpu_custom_call.1} parent=1 // pred_region
      %56 = dma.done [#allocation3], 256
    $region21: #{tpu_custom_call.1} parent=1 // pred_fallthru
      _
    // Predicated region
    $region22: #{tpu_custom_call.1} parent=1 // pred_check
      _
    $region23: #{tpu_custom_call.1} parent=1 // pred_check_branch
      %58 = sbr.rel (0) target = $region25
    $region24: #{tpu_custom_call.1} parent=1 // pred_region
      %60 = dma.done [#allocation6], 1024
    $region25: #{tpu_custom_call.1} parent=1 // pred_fallthru
      _
    // Predicated region
    $region26: #{tpu_custom_call.1} parent=1 // pred_check
      _
    $region27: #{tpu_custom_call.1} parent=1 // pred_check_branch
      %62 = sbr.rel (0) target = $region29
    $region28: #{tpu_custom_call.1} parent=1 // pred_region
      %64 = dma.done [#allocation6], 512
    $region29: #{tpu_custom_call.1} parent=1 // pred_fallthru
      _
    %v66 = vld [vmem:[#allocation2] sm:$0xff]
    %v67 = vld [vmem:[#allocation2 + $0x8] sm:$0xff]
    %vm68 = vcmask 261120
    %v69 = vsel %vm68, %v66, 0.0
    %70 = vadd.xlane.f32.xlu0 %v69
    %v71 = vpop.xlane.xlu0 %70
    %v72 = vsel %vm68, %v67, 0.0
    %73 = vadd.xlane.f32.xlu0 %v72
    %v74 = vpop.xlane.xlu0 %73
    %v75 = vrcp.pop 32.0
    %v76 = vmul.f32 32.0, %v75
    %v77 = vsub.f32 1.0, %v76
    %v78 = vmul.f32 %v75, %v77
    %v79 = vadd.f32 %v75, %v78
    %vm80 = vweird.f32 %v75
    %v81 = vsel %vm80, %v75, %v79
    %v82 = vmul.f32 %v71, %v81
    %v83 = vmul.f32 %v74, %v81
    %v84 = vsub.f32 %v66, %v82
    %v85 = vsub.f32 %v67, %v83
    %v86 = vmul.f32 %v84, %v84
    %v87 = vmul.f32 %v85, %v85
    %v88 = vsel %vm68, %v86, 0.0
    %89 = vadd.xlane.f32.xlu0 %v88
    %v90 = vpop.xlane.xlu0 %89
    %v91 = vsel %vm68, %v87, 0.0
    %92 = vadd.xlane.f32.xlu0 %v91
    %v93 = vpop.xlane.xlu0 %92
    %v94 = vmul.f32 %v90, %v81
    %v95 = vmul.f32 %v93, %v81
    %v96 = vadd.f32 %v94, 1e-05
    %v97 = vadd.f32 %v95, 1e-05
    %v98 = vrsqrt.pop %v96
    %v99 = vmul.f32 %v98, %v96
    %v100 = vmul.f32 %v99, %v98
    %v101 = vmul.f32 0.5, %v100
    %v102 = vsub.f32 1.5, %v101
    %v103 = vmul.f32 %v98, %v102
    %vm104 = vweird.f32 %v96
    %vm105 = vweird.f32 %v98
    %vm106 = vmor %vm104, %vm105
    %v107 = vsel %vm106, %v98, %v103
    %v108 = vrsqrt.pop %v97
    %v109 = vmul.f32 %v108, %v97
    %v110 = vmul.f32 %v109, %v108
    %v111 = vmul.f32 0.5, %v110
    %v112 = vsub.f32 1.5, %v111
    %v113 = vmul.f32 %v108, %v112
    %vm114 = vweird.f32 %v97
    %vm115 = vweird.f32 %v108
    %vm116 = vmor %vm114, %vm115
    %v117 = vsel %vm116, %v108, %v113
    %v118 = vmul.f32 %v84, %v107
    %v119 = vmul.f32 %v85, %v117
    %v120 = vpack.c.bf16 %v118, %v118
    %v121 = vpack.c.bf16 %v119, %v119
    %v122 = vld [vmem:[#allocation5] sm:$0xf]
    %v123 = vld [vmem:[#allocation5 + $0x4] sm:$0xf]
    %v124 = vld [vmem:[#allocation5 + $0x8] sm:$0xf]
    %v125 = vld [vmem:[#allocation5 + $0xc] sm:$0xf]
    %v126 = vld [vmem:[#allocation5 + $0x10] sm:$0xf]
    %v127 = vld [vmem:[#allocation5 + $0x14] sm:$0xf]
    %v128 = vld [vmem:[#allocation5 + $0x18] sm:$0xf]
    %v129 = vld [vmem:[#allocation5 + $0x1c] sm:$0xf]
    %v130 = vld [vmem:[#allocation5 + $0x20] sm:$0xf]
    %v131 = vld [vmem:[#allocation5 + $0x24] sm:$0xf]
    %v132 = vld [vmem:[#allocation5 + $0x28] sm:$0xf]
    %v133 = vld [vmem:[#allocation5 + $0x2c] sm:$0xf]
    %v134 = vld [vmem:[#allocation5 + $0x30] sm:$0xf]
    %v135 = vld [vmem:[#allocation5 + $0x34] sm:$0xf]
    %v136 = vld [vmem:[#allocation5 + $0x38] sm:$0xf]
    %v137 = vld [vmem:[#allocation5 + $0x3c] sm:$0xf]
    %v140 = vunpack.c.l.b16 %v120
    %v141 = vunpack.c.l.b16 %v121
    %v142 = vpack.c.b16 %v141, %v140
    %v147 = vunpack.c.l.b16 %v122
    %v148 = vunpack.c.l.b16 %v123
    %v149 = vunpack.c.l.b16 %v124
    %v150 = vunpack.c.l.b16 %v125
    %v151 = vpack.c.b16 %v148, %v147
    %v152 = vpack.c.b16 %v150, %v149
    %v156 = vsel %vm68, %v142, 0
    %158 = vmatpush.bf16.msra.mxu0 0
    %159 = vmatpush.bf16.msra.mxu0 0
    %160 = vmatpush.bf16.msra.mxu0 0
    %161 = vmatpush.bf16.msra.mxu0 0
    %162 = vmatpush.bf16.msra.mxu0 0
    %163 = vmatpush.bf16.msra.mxu0 0
    %164 = vmatpush.bf16.msra.mxu0 %v152
    %165 = vmatpush.bf16.msra.mxu0 %v151
    %166 = vmatmul.bf16.gmra.mxu0 %v156
    %v167 = vpop.f32.mrf.mxu0
    %v168 = vadd.f32 0.0, %v167
    %v169 = vpop.f32.mrf.mxu0
    %v170 = vadd.f32 0.0, %v169
    %171 = vdwg.mxu0
    %v176 = vunpack.c.l.b16 %v126
    %v177 = vunpack.c.l.b16 %v127
    %v178 = vunpack.c.l.b16 %v128
    %v179 = vunpack.c.l.b16 %v129
    %v180 = vpack.c.b16 %v177, %v176
    %v181 = vpack.c.b16 %v179, %v178
    %184 = vmatpush.bf16.msra.mxu0 0
    %185 = vmatpush.bf16.msra.mxu0 0
    %186 = vmatpush.bf16.msra.mxu0 0
    %187 = vmatpush.bf16.msra.mxu0 0
    %188 = vmatpush.bf16.msra.mxu0 0
    %189 = vmatpush.bf16.msra.mxu0 0
    %190 = vmatpush.bf16.msra.mxu0 %v181
    %191 = vmatpush.bf16.msra.mxu0 %v180
    %192 = vmatmul.bf16.gmra.mxu0 %v156
    %v193 = vpop.f32.mrf.mxu0
    %v194 = vadd.f32 0.0, %v193
    %v195 = vpop.f32.mrf.mxu0
    %v196 = vadd.f32 0.0, %v195
    %197 = vdwg.mxu0
    %v202 = vunpack.c.l.b16 %v130
    %v203 = vunpack.c.l.b16 %v131
    %v204 = vunpack.c.l.b16 %v132
    %v205 = vunpack.c.l.b16 %v133
    %v206 = vpack.c.b16 %v203, %v202
    %v207 = vpack.c.b16 %v205, %v204
    %210 = vmatpush.bf16.msra.mxu0 0
    %211 = vmatpush.bf16.msra.mxu0 0
    %212 = vmatpush.bf16.msra.mxu0 0
    %213 = vmatpush.bf16.msra.mxu0 0
    %214 = vmatpush.bf16.msra.mxu0 0
    %215 = vmatpush.bf16.msra.mxu0 0
    %216 = vmatpush.bf16.msra.mxu0 %v207
    %217 = vmatpush.bf16.msra.mxu0 %v206
    %218 = vmatmul.bf16.gmra.mxu0 %v156
    %v219 = vpop.f32.mrf.mxu0
    %v220 = vadd.f32 0.0, %v219
    %v221 = vpop.f32.mrf.mxu0
    %v222 = vadd.f32 0.0, %v221
    %223 = vdwg.mxu0
    %v228 = vunpack.c.l.b16 %v134
    %v229 = vunpack.c.l.b16 %v135
    %v230 = vunpack.c.l.b16 %v136
    %v231 = vunpack.c.l.b16 %v137
    %v232 = vpack.c.b16 %v229, %v228
    %v233 = vpack.c.b16 %v231, %v230
    %236 = vmatpush.bf16.msra.mxu0 0
    %237 = vmatpush.bf16.msra.mxu0 0
    %238 = vmatpush.bf16.msra.mxu0 0
    %239 = vmatpush.bf16.msra.mxu0 0
    %240 = vmatpush.bf16.msra.mxu0 0
    %241 = vmatpush.bf16.msra.mxu0 0
    %242 = vmatpush.bf16.msra.mxu0 %v233
    %243 = vmatpush.bf16.msra.mxu0 %v232
    %244 = vmatmul.bf16.gmra.mxu0 %v156
    %v245 = vpop.f32.mrf.mxu0
    %v246 = vadd.f32 0.0, %v245
    %v247 = vpop.f32.mrf.mxu0
    %v248 = vadd.f32 0.0, %v247
    %249 = vdwg.mxu0
    %v250 = vmul.f32 %v168, %v168
    %v251 = vmul.f32 %v170, %v170
    %v252 = vmul.f32 %v194, %v194
    %v253 = vmul.f32 %v196, %v196
    %v254 = vmul.f32 %v220, %v220
    %v255 = vmul.f32 %v222, %v222
    %v256 = vmul.f32 %v246, %v246
    %v257 = vmul.f32 %v248, %v248
    %vm258 = vcmask 130048
    %v259 = vsel %vm258, %v250, 0.0
    %260 = vadd.xlane.f32.xlu0 %v259
    %v261 = vpop.xlane.xlu0 %260
    %v262 = vsel %vm258, %v251, 0.0
    %263 = vadd.xlane.f32.xlu0 %v262
    %v264 = vpop.xlane.xlu0 %263
    %v265 = vsel %vm258, %v252, 0.0
    %266 = vadd.xlane.f32.xlu0 %v265
    %v267 = vpop.xlane.xlu0 %266
    %v268 = vsel %vm258, %v253, 0.0
    %269 = vadd.xlane.f32.xlu0 %v268
    %v270 = vpop.xlane.xlu0 %269
    %v271 = vsel %vm258, %v254, 0.0
    %272 = vadd.xlane.f32.xlu0 %v271
    %v273 = vpop.xlane.xlu0 %272
    %v274 = vsel %vm258, %v255, 0.0
    %275 = vadd.xlane.f32.xlu0 %v274
    %v276 = vpop.xlane.xlu0 %275
    %v277 = vsel %vm258, %v256, 0.0
    %278 = vadd.xlane.f32.xlu0 %v277
    %v279 = vpop.xlane.xlu0 %278
    %v280 = vsel %vm258, %v257, 0.0
    %281 = vadd.xlane.f32.xlu0 %v280
    %v282 = vpop.xlane.xlu0 %281
    %v283 = vmax.f32 %v261, 1e-24
    %v284 = vmax.f32 %v264, 1e-24
    %v285 = vmax.f32 %v267, 1e-24
    %v286 = vmax.f32 %v270, 1e-24
    %v287 = vmax.f32 %v273, 1e-24
    %v288 = vmax.f32 %v276, 1e-24
    %v289 = vmax.f32 %v279, 1e-24
    %v290 = vmax.f32 %v282, 1e-24
    %v291 = vrsqrt.pop %v283
    %v292 = vmul.f32 %v291, %v283
    %v293 = vmul.f32 %v292, %v291
    %v294 = vmul.f32 0.5, %v293
    %v295 = vsub.f32 1.5, %v294
    %v296 = vmul.f32 %v291, %v295
    %vm297 = vweird.f32 %v283
    %vm298 = vweird.f32 %v291
    %vm299 = vmor %vm297, %vm298
    %v300 = vsel %vm299, %v291, %v296
    %v301 = vrsqrt.pop %v284
    %v302 = vmul.f32 %v301, %v284
    %v303 = vmul.f32 %v302, %v301
    %v304 = vmul.f32 0.5, %v303
    %v305 = vsub.f32 1.5, %v304
    %v306 = vmul.f32 %v301, %v305
    %vm307 = vweird.f32 %v284
    %vm308 = vweird.f32 %v301
    %vm309 = vmor %vm307, %vm308
    %v310 = vsel %vm309, %v301, %v306
    %v311 = vrsqrt.pop %v285
    %v312 = vmul.f32 %v311, %v285
    %v313 = vmul.f32 %v312, %v311
    %v314 = vmul.f32 0.5, %v313
    %v315 = vsub.f32 1.5, %v314
    %v316 = vmul.f32 %v311, %v315
    %vm317 = vweird.f32 %v285
    %vm318 = vweird.f32 %v311
    %vm319 = vmor %vm317, %vm318
    %v320 = vsel %vm319, %v311, %v316
    %v321 = vrsqrt.pop %v286
    %v322 = vmul.f32 %v321, %v286
    %v323 = vmul.f32 %v322, %v321
    %v324 = vmul.f32 0.5, %v323
    %v325 = vsub.f32 1.5, %v324
    %v326 = vmul.f32 %v321, %v325
    %vm327 = vweird.f32 %v286
    %vm328 = vweird.f32 %v321
    %vm329 = vmor %vm327, %vm328
    %v330 = vsel %vm329, %v321, %v326
    %v331 = vrsqrt.pop %v287
    %v332 = vmul.f32 %v331, %v287
    %v333 = vmul.f32 %v332, %v331
    %v334 = vmul.f32 0.5, %v333
    %v335 = vsub.f32 1.5, %v334
    %v336 = vmul.f32 %v331, %v335
    %vm337 = vweird.f32 %v287
    %vm338 = vweird.f32 %v331
    %vm339 = vmor %vm337, %vm338
    %v340 = vsel %vm339, %v331, %v336
    %v341 = vrsqrt.pop %v288
    %v342 = vmul.f32 %v341, %v288
    %v343 = vmul.f32 %v342, %v341
    %v344 = vmul.f32 0.5, %v343
    %v345 = vsub.f32 1.5, %v344
    %v346 = vmul.f32 %v341, %v345
    %vm347 = vweird.f32 %v288
    %vm348 = vweird.f32 %v341
    %vm349 = vmor %vm347, %vm348
    %v350 = vsel %vm349, %v341, %v346
    %v351 = vrsqrt.pop %v289
    %v352 = vmul.f32 %v351, %v289
    %v353 = vmul.f32 %v352, %v351
    %v354 = vmul.f32 0.5, %v353
    %v355 = vsub.f32 1.5, %v354
    %v356 = vmul.f32 %v351, %v355
    %vm357 = vweird.f32 %v289
    %vm358 = vweird.f32 %v351
    %vm359 = vmor %vm357, %vm358
    %v360 = vsel %vm359, %v351, %v356
    %v361 = vrsqrt.pop %v290
    %v362 = vmul.f32 %v361, %v290
    %v363 = vmul.f32 %v362, %v361
    %v364 = vmul.f32 0.5, %v363
    %v365 = vsub.f32 1.5, %v364
    %v366 = vmul.f32 %v361, %v365
    %vm367 = vweird.f32 %v290
    %vm368 = vweird.f32 %v361
    %vm369 = vmor %vm367, %vm368
    %v370 = vsel %vm369, %v361, %v366
    %v371 = vmul.f32 %v168, %v300
    %v372 = vmul.f32 %v170, %v310
    %v373 = vmul.f32 %v194, %v320
    %v374 = vmul.f32 %v196, %v330
    %v375 = vmul.f32 %v220, %v340
    %v376 = vmul.f32 %v222, %v350
    %v377 = vmul.f32 %v246, %v360
    %v378 = vmul.f32 %v248, %v370
    %v379 = vld [vmem:[%s2] sm:$0x1]
    %v381 = vperm.slane %v379, 0
    %v383 = vmul.f32 %v371, %v381
    %v384 = vmul.f32 %v372, %v381
    %v385 = vmul.f32 %v373, %v381
    %v386 = vmul.f32 %v374, %v381
    %v387 = vmul.f32 %v375, %v381
    %v388 = vmul.f32 %v376, %v381
    %v389 = vmul.f32 %v377, %v381
    %v390 = vmul.f32 %v378, %v381
    %399 = vrot.lane.b32.xlu0 %v250, 112
    %v400 = vpop.permute.xlu0 %399
    %401 = vrot.lane.b32.xlu0 %v251, 112
    %v402 = vpop.permute.xlu0 %401
    %403 = vrot.lane.b32.xlu0 %v252, 112
    %v404 = vpop.permute.xlu0 %403
    %405 = vrot.lane.b32.xlu0 %v253, 112
    %v406 = vpop.permute.xlu0 %405
    %407 = vrot.lane.b32.xlu0 %v254, 112
    %v408 = vpop.permute.xlu0 %407
    %409 = vrot.lane.b32.xlu0 %v255, 112
    %v410 = vpop.permute.xlu0 %409
    %411 = vrot.lane.b32.xlu0 %v256, 112
    %v412 = vpop.permute.xlu0 %411
    %413 = vrot.lane.b32.xlu0 %v257, 112
    %v414 = vpop.permute.xlu0 %413
    %v423 = vsel %vm258, %v400, 0.0
    %424 = vadd.xlane.f32.xlu0 %v423
    %v425 = vpop.xlane.xlu0 %424
    %v426 = vsel %vm258, %v402, 0.0
    %427 = vadd.xlane.f32.xlu0 %v426
    %v428 = vpop.xlane.xlu0 %427
    %v429 = vsel %vm258, %v404, 0.0
    %430 = vadd.xlane.f32.xlu0 %v429
    %v431 = vpop.xlane.xlu0 %430
    %v432 = vsel %vm258, %v406, 0.0
    %433 = vadd.xlane.f32.xlu0 %v432
    %v434 = vpop.xlane.xlu0 %433
    %v435 = vsel %vm258, %v408, 0.0
    %436 = vadd.xlane.f32.xlu0 %v435
    %v437 = vpop.xlane.xlu0 %436
    %v438 = vsel %vm258, %v410, 0.0
    %439 = vadd.xlane.f32.xlu0 %v438
    %v440 = vpop.xlane.xlu0 %439
    %v441 = vsel %vm258, %v412, 0.0
    %442 = vadd.xlane.f32.xlu0 %v441
    %v443 = vpop.xlane.xlu0 %442
    %v444 = vsel %vm258, %v414, 0.0
    %445 = vadd.xlane.f32.xlu0 %v444
    %v446 = vpop.xlane.xlu0 %445
    %v447 = vmax.f32 %v425, 1e-24
    %v448 = vmax.f32 %v428, 1e-24
    %v449 = vmax.f32 %v431, 1e-24
    %v450 = vmax.f32 %v434, 1e-24
    %v451 = vmax.f32 %v437, 1e-24
    %v452 = vmax.f32 %v440, 1e-24
    %v453 = vmax.f32 %v443, 1e-24
    %v454 = vmax.f32 %v446, 1e-24
    %v455 = vrsqrt.pop %v447
    %v456 = vmul.f32 %v455, %v447
    %v457 = vmul.f32 %v456, %v455
    %v458 = vmul.f32 0.5, %v457
    %v459 = vsub.f32 1.5, %v458
    %v460 = vmul.f32 %v455, %v459
    %vm461 = vweird.f32 %v447
    %vm462 = vweird.f32 %v455
    %vm463 = vmor %vm461, %vm462
    %v464 = vsel %vm463, %v455, %v460
    %v465 = vrsqrt.pop %v448
    %v466 = vmul.f32 %v465, %v448
    %v467 = vmul.f32 %v466, %v465
    %v468 = vmul.f32 0.5, %v467
    %v469 = vsub.f32 1.5, %v468
    %v470 = vmul.f32 %v465, %v469
    %vm471 = vweird.f32 %v448
    %vm472 = vweird.f32 %v465
    %vm473 = vmor %vm471, %vm472
    %v474 = vsel %vm473, %v465, %v470
    %v475 = vrsqrt.pop %v449
    %v476 = vmul.f32 %v475, %v449
    %v477 = vmul.f32 %v476, %v475
    %v478 = vmul.f32 0.5, %v477
    %v479 = vsub.f32 1.5, %v478
    %v480 = vmul.f32 %v475, %v479
    %vm481 = vweird.f32 %v449
    %vm482 = vweird.f32 %v475
    %vm483 = vmor %vm481, %vm482
    %v484 = vsel %vm483, %v475, %v480
    %v485 = vrsqrt.pop %v450
    %v486 = vmul.f32 %v485, %v450
    %v487 = vmul.f32 %v486, %v485
    %v488 = vmul.f32 0.5, %v487
    %v489 = vsub.f32 1.5, %v488
    %v490 = vmul.f32 %v485, %v489
    %vm491 = vweird.f32 %v450
    %vm492 = vweird.f32 %v485
    %vm493 = vmor %vm491, %vm492
    %v494 = vsel %vm493, %v485, %v490
    %v495 = vrsqrt.pop %v451
    %v496 = vmul.f32 %v495, %v451
    %v497 = vmul.f32 %v496, %v495
    %v498 = vmul.f32 0.5, %v497
    %v499 = vsub.f32 1.5, %v498
    %v500 = vmul.f32 %v495, %v499
    %vm501 = vweird.f32 %v451
    %vm502 = vweird.f32 %v495
    %vm503 = vmor %vm501, %vm502
    %v504 = vsel %vm503, %v495, %v500
    %v505 = vrsqrt.pop %v452
    %v506 = vmul.f32 %v505, %v452
    %v507 = vmul.f32 %v506, %v505
    %v508 = vmul.f32 0.5, %v507
    %v509 = vsub.f32 1.5, %v508
    %v510 = vmul.f32 %v505, %v509
    %vm511 = vweird.f32 %v452
    %vm512 = vweird.f32 %v505
    %vm513 = vmor %vm511, %vm512
    %v514 = vsel %vm513, %v505, %v510
    %v515 = vrsqrt.pop %v453
    %v516 = vmul.f32 %v515, %v453
    %v517 = vmul.f32 %v516, %v515
    %v518 = vmul.f32 0.5, %v517
    %v519 = vsub.f32 1.5, %v518
    %v520 = vmul.f32 %v515, %v519
    %vm521 = vweird.f32 %v453
    %vm522 = vweird.f32 %v515
    %vm523 = vmor %vm521, %vm522
    %v524 = vsel %vm523, %v515, %v520
    %v525 = vrsqrt.pop %v454
    %v526 = vmul.f32 %v525, %v454
    %v527 = vmul.f32 %v526, %v525
    %v528 = vmul.f32 0.5, %v527
    %v529 = vsub.f32 1.5, %v528
    %v530 = vmul.f32 %v525, %v529
    %vm531 = vweird.f32 %v454
    %vm532 = vweird.f32 %v525
    %vm533 = vmor %vm531, %vm532
    %v534 = vsel %vm533, %v525, %v530
    %v535 = vmul.f32 %v168, %v464
    %v536 = vmul.f32 %v170, %v474
    %v537 = vmul.f32 %v194, %v484
    %v538 = vmul.f32 %v196, %v494
    %v539 = vmul.f32 %v220, %v504
    %v540 = vmul.f32 %v222, %v514
    %v541 = vmul.f32 %v246, %v524
    %v542 = vmul.f32 %v248, %v534
    %v543 = vpack.c.bf16 %v383, %v383
    %v544 = vpack.c.bf16 %v384, %v384
    %v545 = vpack.c.bf16 %v385, %v385
    %v546 = vpack.c.bf16 %v386, %v386
    %v547 = vpack.c.bf16 %v387, %v387
    %v548 = vpack.c.bf16 %v388, %v388
    %v549 = vpack.c.bf16 %v389, %v389
    %v550 = vpack.c.bf16 %v390, %v390
    %v551 = vpack.c.bf16 %v535, %v535
    %v552 = vpack.c.bf16 %v536, %v536
    %v553 = vpack.c.bf16 %v537, %v537
    %v554 = vpack.c.bf16 %v538, %v538
    %v555 = vpack.c.bf16 %v539, %v539
    %v556 = vpack.c.bf16 %v540, %v540
    %v557 = vpack.c.bf16 %v541, %v541
    %v558 = vpack.c.bf16 %v542, %v542
    %v559 = vpack.c.bf16 %v168, %v168
    %v560 = vpack.c.bf16 %v170, %v170
    %v561 = vpack.c.bf16 %v194, %v194
    %v562 = vpack.c.bf16 %v196, %v196
    %v563 = vpack.c.bf16 %v220, %v220
    %v564 = vpack.c.bf16 %v222, %v222
    %v565 = vpack.c.bf16 %v246, %v246
    %v566 = vpack.c.bf16 %v248, %v248
    %v568 = vunpack.c.l.b16 %v551
    %v569 = vpack.c.b16 %v568, %v568
    %570 = vrot.lane.b32.xlu0 %v569, 112
    %v571 = vpop.permute.xlu0 %570
    %v573 = vsel %vm258, %v543, 0
    %v576 = vsel %vm258, %v571, 0
    %578 = vmatpush.bf16.xpose.msra.mxu0 0
    %579 = vmatpush.bf16.xpose.msra.mxu0 0
    %580 = vmatpush.bf16.xpose.msra.mxu0 0
    %581 = vmatpush.bf16.xpose.msra.mxu0 0
    %582 = vmatpush.bf16.xpose.msra.mxu0 0
    %583 = vmatpush.bf16.xpose.msra.mxu0 0
    %584 = vmatpush.bf16.xpose.msra.mxu0 0
    %585 = vmatpush.bf16.xpose.msra.mxu0 %v576
    %586 = vmatmul.bf16.gmra.mxu0 %v573
    %v587 = vpop.f32.mrf.mxu0
    %v588 = vadd.f32 0.0, %v587
    %v589 = vpop.f32.mrf.mxu0
    %590 = vdwg.mxu0
    %v592 = vunpack.c.l.b16 %v552
    %v593 = vpack.c.b16 %v592, %v592
    %594 = vrot.lane.b32.xlu0 %v593, 112
    %v595 = vpop.permute.xlu0 %594
    %v597 = vsel %vm258, %v544, 0
    %v600 = vsel %vm258, %v595, 0
    %602 = vmatpush.bf16.xpose.msra.mxu0 0
    %603 = vmatpush.bf16.xpose.msra.mxu0 0
    %604 = vmatpush.bf16.xpose.msra.mxu0 0
    %605 = vmatpush.bf16.xpose.msra.mxu0 0
    %606 = vmatpush.bf16.xpose.msra.mxu0 0
    %607 = vmatpush.bf16.xpose.msra.mxu0 0
    %608 = vmatpush.bf16.xpose.msra.mxu0 0
    %609 = vmatpush.bf16.xpose.msra.mxu0 %v600
    %610 = vmatmul.bf16.gmra.mxu0 %v597
    %v611 = vpop.f32.mrf.mxu0
    %v612 = vadd.f32 0.0, %v611
    %v613 = vpop.f32.mrf.mxu0
    %614 = vdwg.mxu0
    %v616 = vunpack.c.l.b16 %v553
    %v617 = vpack.c.b16 %v616, %v616
    %618 = vrot.lane.b32.xlu0 %v617, 112
    %v619 = vpop.permute.xlu0 %618
    %v621 = vsel %vm258, %v545, 0
    %v624 = vsel %vm258, %v619, 0
    %626 = vmatpush.bf16.xpose.msra.mxu0 0
    %627 = vmatpush.bf16.xpose.msra.mxu0 0
    %628 = vmatpush.bf16.xpose.msra.mxu0 0
    %629 = vmatpush.bf16.xpose.msra.mxu0 0
    %630 = vmatpush.bf16.xpose.msra.mxu0 0
    %631 = vmatpush.bf16.xpose.msra.mxu0 0
    %632 = vmatpush.bf16.xpose.msra.mxu0 0
    %633 = vmatpush.bf16.xpose.msra.mxu0 %v624
    %634 = vmatmul.bf16.gmra.mxu0 %v621
    %v635 = vpop.f32.mrf.mxu0
    %v636 = vadd.f32 0.0, %v635
    %v637 = vpop.f32.mrf.mxu0
    %638 = vdwg.mxu0
    %v640 = vunpack.c.l.b16 %v554
    %v641 = vpack.c.b16 %v640, %v640
    %642 = vrot.lane.b32.xlu0 %v641, 112
    %v643 = vpop.permute.xlu0 %642
    %v645 = vsel %vm258, %v546, 0
    %v648 = vsel %vm258, %v643, 0
    %650 = vmatpush.bf16.xpose.msra.mxu0 0
    %651 = vmatpush.bf16.xpose.msra.mxu0 0
    %652 = vmatpush.bf16.xpose.msra.mxu0 0
    %653 = vmatpush.bf16.xpose.msra.mxu0 0
    %654 = vmatpush.bf16.xpose.msra.mxu0 0
    %655 = vmatpush.bf16.xpose.msra.mxu0 0
    %656 = vmatpush.bf16.xpose.msra.mxu0 0
    %657 = vmatpush.bf16.xpose.msra.mxu0 %v648
    %658 = vmatmul.bf16.gmra.mxu0 %v645
    %v659 = vpop.f32.mrf.mxu0
    %v660 = vadd.f32 0.0, %v659
    %v661 = vpop.f32.mrf.mxu0
    %662 = vdwg.mxu0
    %v664 = vunpack.c.l.b16 %v555
    %v665 = vpack.c.b16 %v664, %v664
    %666 = vrot.lane.b32.xlu0 %v665, 112
    %v667 = vpop.permute.xlu0 %666
    %v669 = vsel %vm258, %v547, 0
    %v672 = vsel %vm258, %v667, 0
    %674 = vmatpush.bf16.xpose.msra.mxu0 0
    %675 = vmatpush.bf16.xpose.msra.mxu0 0
    %676 = vmatpush.bf16.xpose.msra.mxu0 0
    %677 = vmatpush.bf16.xpose.msra.mxu0 0
    %678 = vmatpush.bf16.xpose.msra.mxu0 0
    %679 = vmatpush.bf16.xpose.msra.mxu0 0
    %680 = vmatpush.bf16.xpose.msra.mxu0 0
    %681 = vmatpush.bf16.xpose.msra.mxu0 %v672
    %682 = vmatmul.bf16.gmra.mxu0 %v669
    %v683 = vpop.f32.mrf.mxu0
    %v684 = vadd.f32 0.0, %v683
    %v685 = vpop.f32.mrf.mxu0
    %686 = vdwg.mxu0
    %v688 = vunpack.c.l.b16 %v556
    %v689 = vpack.c.b16 %v688, %v688
    %690 = vrot.lane.b32.xlu0 %v689, 112
    %v691 = vpop.permute.xlu0 %690
    %v693 = vsel %vm258, %v548, 0
    %v696 = vsel %vm258, %v691, 0
    %698 = vmatpush.bf16.xpose.msra.mxu0 0
    %699 = vmatpush.bf16.xpose.msra.mxu0 0
    %700 = vmatpush.bf16.xpose.msra.mxu0 0
    %701 = vmatpush.bf16.xpose.msra.mxu0 0
    %702 = vmatpush.bf16.xpose.msra.mxu0 0
    %703 = vmatpush.bf16.xpose.msra.mxu0 0
    %704 = vmatpush.bf16.xpose.msra.mxu0 0
    %705 = vmatpush.bf16.xpose.msra.mxu0 %v696
    %706 = vmatmul.bf16.gmra.mxu0 %v693
    %v707 = vpop.f32.mrf.mxu0
    %v708 = vadd.f32 0.0, %v707
    %v709 = vpop.f32.mrf.mxu0
    %710 = vdwg.mxu0
    %v712 = vunpack.c.l.b16 %v557
    %v713 = vpack.c.b16 %v712, %v712
    %714 = vrot.lane.b32.xlu0 %v713, 112
    %v715 = vpop.permute.xlu0 %714
    %v717 = vsel %vm258, %v549, 0
    %v720 = vsel %vm258, %v715, 0
    %722 = vmatpush.bf16.xpose.msra.mxu0 0
    %723 = vmatpush.bf16.xpose.msra.mxu0 0
    %724 = vmatpush.bf16.xpose.msra.mxu0 0
    %725 = vmatpush.bf16.xpose.msra.mxu0 0
    %726 = vmatpush.bf16.xpose.msra.mxu0 0
    %727 = vmatpush.bf16.xpose.msra.mxu0 0
    %728 = vmatpush.bf16.xpose.msra.mxu0 0
    %729 = vmatpush.bf16.xpose.msra.mxu0 %v720
    %730 = vmatmul.bf16.gmra.mxu0 %v717
    %v731 = vpop.f32.mrf.mxu0
    %v732 = vadd.f32 0.0, %v731
    %v733 = vpop.f32.mrf.mxu0
    %734 = vdwg.mxu0
    %v736 = vunpack.c.l.b16 %v558
    %v737 = vpack.c.b16 %v736, %v736
    %738 = vrot.lane.b32.xlu0 %v737, 112
    %v739 = vpop.permute.xlu0 %738
    %v741 = vsel %vm258, %v550, 0
    %v744 = vsel %vm258, %v739, 0
    %746 = vmatpush.bf16.xpose.msra.mxu0 0
    %747 = vmatpush.bf16.xpose.msra.mxu0 0
    %748 = vmatpush.bf16.xpose.msra.mxu0 0
    %749 = vmatpush.bf16.xpose.msra.mxu0 0
    %750 = vmatpush.bf16.xpose.msra.mxu0 0
    %751 = vmatpush.bf16.xpose.msra.mxu0 0
    %752 = vmatpush.bf16.xpose.msra.mxu0 0
    %753 = vmatpush.bf16.xpose.msra.mxu0 %v744
    %754 = vmatmul.bf16.gmra.mxu0 %v741
    %v755 = vpop.f32.mrf.mxu0
    %v756 = vadd.f32 0.0, %v755
    %v757 = vpop.f32.mrf.mxu0
    %758 = vdwg.mxu0
    %v759 = vmul.f32 %v588, 1.442695
    %v760 = vpow.pop %v759
    %v761 = vmul.f32 %v612, 1.442695
    %v762 = vpow.pop %v761
    %v763 = vmul.f32 %v636, 1.442695
    %v764 = vpow.pop %v763
    %v765 = vmul.f32 %v660, 1.442695
    %v766 = vpow.pop %v765
    %v767 = vmul.f32 %v684, 1.442695
    %v768 = vpow.pop %v767
    %v769 = vmul.f32 %v708, 1.442695
    %v770 = vpow.pop %v769
    %v771 = vmul.f32 %v732, 1.442695
    %v772 = vpow.pop %v771
    %v773 = vmul.f32 %v756, 1.442695
    %v774 = vpow.pop %v773
    %vm775 = vcmask 64512
    %v776 = vsel %vm775, %v760, 0.0
    %777 = vadd.xlane.f32.xlu0 %v776
    %v778 = vpop.xlane.xlu0 %777
    %v779 = vsel %vm775, %v762, 0.0
    %780 = vadd.xlane.f32.xlu0 %v779
    %v781 = vpop.xlane.xlu0 %780
    %v782 = vsel %vm775, %v764, 0.0
    %783 = vadd.xlane.f32.xlu0 %v782
    %v784 = vpop.xlane.xlu0 %783
    %v785 = vsel %vm775, %v766, 0.0
    %786 = vadd.xlane.f32.xlu0 %v785
    %v787 = vpop.xlane.xlu0 %786
    %v788 = vsel %vm775, %v768, 0.0
    %789 = vadd.xlane.f32.xlu0 %v788
    %v790 = vpop.xlane.xlu0 %789
    %v791 = vsel %vm775, %v770, 0.0
    %792 = vadd.xlane.f32.xlu0 %v791
    %v793 = vpop.xlane.xlu0 %792
    %v794 = vsel %vm775, %v772, 0.0
    %795 = vadd.xlane.f32.xlu0 %v794
    %v796 = vpop.xlane.xlu0 %795
    %v797 = vsel %vm775, %v774, 0.0
    %798 = vadd.xlane.f32.xlu0 %v797
    %v799 = vpop.xlane.xlu0 %798
    %v800 = vrcp.pop %v778
    %v801 = vrcp.pop %v781
    %v802 = vrcp.pop %v784
    %v803 = vrcp.pop %v787
    %v804 = vrcp.pop %v790
    %v805 = vrcp.pop %v793
    %v806 = vrcp.pop %v796
    %v807 = vrcp.pop %v799
    %v808 = vmul.f32 %v760, %v800
    %v809 = vmul.f32 %v762, %v801
    %v810 = vmul.f32 %v764, %v802
    %v811 = vmul.f32 %v766, %v803
    %v812 = vmul.f32 %v768, %v804
    %v813 = vmul.f32 %v770, %v805
    %v814 = vmul.f32 %v772, %v806
    %v815 = vmul.f32 %v774, %v807
    %v816 = vpack.c.bf16 %v808, %v808
    %v817 = vpack.c.bf16 %v809, %v809
    %v818 = vpack.c.bf16 %v810, %v810
    %v819 = vpack.c.bf16 %v811, %v811
    %v820 = vpack.c.bf16 %v812, %v812
    %v821 = vpack.c.bf16 %v813, %v813
    %v822 = vpack.c.bf16 %v814, %v814
    %v823 = vpack.c.bf16 %v815, %v815
    %v825 = vunpack.c.l.b16 %v559
    %v826 = vpack.c.b16 %v825, %v825
    %827 = vrot.lane.b32.xlu0 %v826, 96
    %v828 = vpop.permute.xlu0 %827
    %v830 = vsel %vm775, %v816, 0
    %vm832 = vcmask 1043456
    %v834 = vsel %vm832, %v828, 0
    %836 = vmatpush.bf16.msra.mxu0 0
    %837 = vmatpush.bf16.msra.mxu0 0
    %838 = vmatpush.bf16.msra.mxu0 0
    %839 = vmatpush.bf16.msra.mxu0 0
    %840 = vmatpush.bf16.msra.mxu0 0
    %841 = vmatpush.bf16.msra.mxu0 0
    %842 = vmatpush.bf16.msra.mxu0 0
    %843 = vmatpush.bf16.msra.mxu0 %v834
    %844 = vmatmul.bf16.gmra.mxu0 %v830
    %v845 = vpop.f32.mrf.mxu0
    %v846 = vadd.f32 0.0, %v845
    %v847 = vpop.f32.mrf.mxu0
    %848 = vdwg.mxu0
    %v850 = vunpack.c.l.b16 %v560
    %v851 = vpack.c.b16 %v850, %v850
    %852 = vrot.lane.b32.xlu0 %v851, 96
    %v853 = vpop.permute.xlu0 %852
    %v855 = vsel %vm775, %v817, 0
    %v858 = vsel %vm832, %v853, 0
    %860 = vmatpush.bf16.msra.mxu0 0
    %861 = vmatpush.bf16.msra.mxu0 0
    %862 = vmatpush.bf16.msra.mxu0 0
    %863 = vmatpush.bf16.msra.mxu0 0
    %864 = vmatpush.bf16.msra.mxu0 0
    %865 = vmatpush.bf16.msra.mxu0 0
    %866 = vmatpush.bf16.msra.mxu0 0
    %867 = vmatpush.bf16.msra.mxu0 %v858
    %868 = vmatmul.bf16.gmra.mxu0 %v855
    %v869 = vpop.f32.mrf.mxu0
    %v870 = vadd.f32 0.0, %v869
    %v871 = vpop.f32.mrf.mxu0
    %872 = vdwg.mxu0
    %v874 = vunpack.c.l.b16 %v561
    %v875 = vpack.c.b16 %v874, %v874
    %876 = vrot.lane.b32.xlu0 %v875, 96
    %v877 = vpop.permute.xlu0 %876
    %v879 = vsel %vm775, %v818, 0
    %v882 = vsel %vm832, %v877, 0
    %884 = vmatpush.bf16.msra.mxu0 0
    %885 = vmatpush.bf16.msra.mxu0 0
    %886 = vmatpush.bf16.msra.mxu0 0
    %887 = vmatpush.bf16.msra.mxu0 0
    %888 = vmatpush.bf16.msra.mxu0 0
    %889 = vmatpush.bf16.msra.mxu0 0
    %890 = vmatpush.bf16.msra.mxu0 0
    %891 = vmatpush.bf16.msra.mxu0 %v882
    %892 = vmatmul.bf16.gmra.mxu0 %v879
    %v893 = vpop.f32.mrf.mxu0
    %v894 = vadd.f32 0.0, %v893
    %v895 = vpop.f32.mrf.mxu0
    %896 = vdwg.mxu0
    %v898 = vunpack.c.l.b16 %v562
    %v899 = vpack.c.b16 %v898, %v898
    %900 = vrot.lane.b32.xlu0 %v899, 96
    %v901 = vpop.permute.xlu0 %900
    %v903 = vsel %vm775, %v819, 0
    %v906 = vsel %vm832, %v901, 0
    %908 = vmatpush.bf16.msra.mxu0 0
    %909 = vmatpush.bf16.msra.mxu0 0
    %910 = vmatpush.bf16.msra.mxu0 0
    %911 = vmatpush.bf16.msra.mxu0 0
    %912 = vmatpush.bf16.msra.mxu0 0
    %913 = vmatpush.bf16.msra.mxu0 0
    %914 = vmatpush.bf16.msra.mxu0 0
    %915 = vmatpush.bf16.msra.mxu0 %v906
    %916 = vmatmul.bf16.gmra.mxu0 %v903
    %v917 = vpop.f32.mrf.mxu0
    %v918 = vadd.f32 0.0, %v917
    %v919 = vpop.f32.mrf.mxu0
    %920 = vdwg.mxu0
    %v922 = vunpack.c.l.b16 %v563
    %v923 = vpack.c.b16 %v922, %v922
    %924 = vrot.lane.b32.xlu0 %v923, 96
    %v925 = vpop.permute.xlu0 %924
    %v927 = vsel %vm775, %v820, 0
    %v930 = vsel %vm832, %v925, 0
    %932 = vmatpush.bf16.msra.mxu0 0
    %933 = vmatpush.bf16.msra.mxu0 0
    %934 = vmatpush.bf16.msra.mxu0 0
    %935 = vmatpush.bf16.msra.mxu0 0
    %936 = vmatpush.bf16.msra.mxu0 0
    %937 = vmatpush.bf16.msra.mxu0 0
    %938 = vmatpush.bf16.msra.mxu0 0
    %939 = vmatpush.bf16.msra.mxu0 %v930
    %940 = vmatmul.bf16.gmra.mxu0 %v927
    %v941 = vpop.f32.mrf.mxu0
    %v942 = vadd.f32 0.0, %v941
    %v943 = vpop.f32.mrf.mxu0
    %944 = vdwg.mxu0
    %v946 = vunpack.c.l.b16 %v564
    %v947 = vpack.c.b16 %v946, %v946
    %948 = vrot.lane.b32.xlu0 %v947, 96
    %v949 = vpop.permute.xlu0 %948
    %v951 = vsel %vm775, %v821, 0
    %v954 = vsel %vm832, %v949, 0
    %956 = vmatpush.bf16.msra.mxu0 0
    %957 = vmatpush.bf16.msra.mxu0 0
    %958 = vmatpush.bf16.msra.mxu0 0
    %959 = vmatpush.bf16.msra.mxu0 0
    %960 = vmatpush.bf16.msra.mxu0 0
    %961 = vmatpush.bf16.msra.mxu0 0
    %962 = vmatpush.bf16.msra.mxu0 0
    %963 = vmatpush.bf16.msra.mxu0 %v954
    %964 = vmatmul.bf16.gmra.mxu0 %v951
    %v965 = vpop.f32.mrf.mxu0
    %v966 = vadd.f32 0.0, %v965
    %v967 = vpop.f32.mrf.mxu0
    %968 = vdwg.mxu0
    %v970 = vunpack.c.l.b16 %v565
    %v971 = vpack.c.b16 %v970, %v970
    %972 = vrot.lane.b32.xlu0 %v971, 96
    %v973 = vpop.permute.xlu0 %972
    %v975 = vsel %vm775, %v822, 0
    %v978 = vsel %vm832, %v973, 0
    %980 = vmatpush.bf16.msra.mxu0 0
    %981 = vmatpush.bf16.msra.mxu0 0
    %982 = vmatpush.bf16.msra.mxu0 0
    %983 = vmatpush.bf16.msra.mxu0 0
    %984 = vmatpush.bf16.msra.mxu0 0
    %985 = vmatpush.bf16.msra.mxu0 0
    %986 = vmatpush.bf16.msra.mxu0 0
    %987 = vmatpush.bf16.msra.mxu0 %v978
    %988 = vmatmul.bf16.gmra.mxu0 %v975
    %v989 = vpop.f32.mrf.mxu0
    %v990 = vadd.f32 0.0, %v989
    %v991 = vpop.f32.mrf.mxu0
    %992 = vdwg.mxu0
    %v994 = vunpack.c.l.b16 %v566
    %v995 = vpack.c.b16 %v994, %v994
    %996 = vrot.lane.b32.xlu0 %v995, 96
    %v997 = vpop.permute.xlu0 %996
    %v999 = vsel %vm775, %v823, 0
    %v1002 = vsel %vm832, %v997, 0
    %1004 = vmatpush.bf16.msra.mxu0 0
    %1005 = vmatpush.bf16.msra.mxu0 0
    %1006 = vmatpush.bf16.msra.mxu0 0
    %1007 = vmatpush.bf16.msra.mxu0 0
    %1008 = vmatpush.bf16.msra.mxu0 0
    %1009 = vmatpush.bf16.msra.mxu0 0
    %1010 = vmatpush.bf16.msra.mxu0 0
    %1011 = vmatpush.bf16.msra.mxu0 %v1002
    %1012 = vmatmul.bf16.gmra.mxu0 %v999
    %v1013 = vpop.f32.mrf.mxu0
    %v1014 = vadd.f32 0.0, %v1013
    %v1015 = vpop.f32.mrf.mxu0
    %1016 = vdwg.mxu0
    %v1017 = vpack.c.bf16 %v846, %v846
    %v1018 = vpack.c.bf16 %v870, %v870
    %v1019 = vpack.c.bf16 %v894, %v894
    %v1020 = vpack.c.bf16 %v918, %v918
    %v1021 = vpack.c.bf16 %v942, %v942
    %v1022 = vpack.c.bf16 %v966, %v966
    %v1023 = vpack.c.bf16 %v990, %v990
    %v1024 = vpack.c.bf16 %v1014, %v1014
    %v1025 = vld [vmem:[#allocation7] sm:$0xf]
    %v1026 = vld [vmem:[#allocation7 + $0x4] sm:$0xf]
    %v1027 = vld [vmem:[#allocation7 + $0x8] sm:$0xf]
    %v1028 = vld [vmem:[#allocation7 + $0xc] sm:$0xf]
    %v1029 = vld [vmem:[#allocation7 + $0x10] sm:$0xf]
    %v1030 = vld [vmem:[#allocation7 + $0x14] sm:$0xf]
    %v1031 = vld [vmem:[#allocation7 + $0x18] sm:$0xf]
    %v1032 = vld [vmem:[#allocation7 + $0x1c] sm:$0xf]
    %v1035 = vunpack.c.l.b16 %v1017
    %v1036 = vunpack.c.l.b16 %v1018
    %v1037 = vpack.c.b16 %v1036, %v1035
    %v1040 = vunpack.c.l.b16 %v1025
    %v1041 = vunpack.c.l.b16 %v1026
    %v1042 = vpack.c.b16 %v1041, %v1040
    %v1045 = vsel %vm258, %v1037, 0
    %1047 = vmatpush.bf16.msra.mxu0 0
    %1048 = vmatpush.bf16.msra.mxu0 0
    %1049 = vmatpush.bf16.msra.mxu0 0
    %1050 = vmatpush.bf16.msra.mxu0 0
    %1051 = vmatpush.bf16.msra.mxu0 0
    %1052 = vmatpush.bf16.msra.mxu0 0
    %1053 = vmatpush.bf16.msra.mxu0 0
    %1054 = vmatpush.bf16.msra.mxu0 %v1042
    %1055 = vmatmul.bf16.gmra.mxu0 %v1045
    %v1056 = vpop.f32.mrf.mxu0
    %v1057 = vadd.f32 0.0, %v1056
    %v1058 = vpop.f32.mrf.mxu0
    %v1059 = vadd.f32 0.0, %v1058
    %1060 = vdwg.mxu0
    %v1063 = vunpack.c.l.b16 %v1019
    %v1064 = vunpack.c.l.b16 %v1020
    %v1065 = vpack.c.b16 %v1064, %v1063
    %v1068 = vunpack.c.l.b16 %v1027
    %v1069 = vunpack.c.l.b16 %v1028
    %v1070 = vpack.c.b16 %v1069, %v1068
    %v1073 = vsel %vm258, %v1065, 0
    %1075 = vmatpush.bf16.msra.mxu0 0
    %1076 = vmatpush.bf16.msra.mxu0 0
    %1077 = vmatpush.bf16.msra.mxu0 0
    %1078 = vmatpush.bf16.msra.mxu0 0
    %1079 = vmatpush.bf16.msra.mxu0 0
    %1080 = vmatpush.bf16.msra.mxu0 0
    %1081 = vmatpush.bf16.msra.mxu0 0
    %1082 = vmatpush.bf16.msra.mxu0 %v1070
    %1083 = vmatmul.bf16.gmra.mxu0 %v1073
    %v1084 = vpop.f32.mrf.mxu0
    %v1085 = vadd.f32 0.0, %v1084
    %v1086 = vpop.f32.mrf.mxu0
    %v1087 = vadd.f32 0.0, %v1086
    %1088 = vdwg.mxu0
    %v1091 = vunpack.c.l.b16 %v1021
    %v1092 = vunpack.c.l.b16 %v1022
    %v1093 = vpack.c.b16 %v1092, %v1091
    %v1096 = vunpack.c.l.b16 %v1029
    %v1097 = vunpack.c.l.b16 %v1030
    %v1098 = vpack.c.b16 %v1097, %v1096
    %v1101 = vsel %vm258, %v1093, 0
    %1103 = vmatpush.bf16.msra.mxu0 0
    %1104 = vmatpush.bf16.msra.mxu0 0
    %1105 = vmatpush.bf16.msra.mxu0 0
    %1106 = vmatpush.bf16.msra.mxu0 0
    %1107 = vmatpush.bf16.msra.mxu0 0
    %1108 = vmatpush.bf16.msra.mxu0 0
    %1109 = vmatpush.bf16.msra.mxu0 0
    %1110 = vmatpush.bf16.msra.mxu0 %v1098
    %1111 = vmatmul.bf16.gmra.mxu0 %v1101
    %v1112 = vpop.f32.mrf.mxu0
    %v1113 = vadd.f32 0.0, %v1112
    %v1114 = vpop.f32.mrf.mxu0
    %v1115 = vadd.f32 0.0, %v1114
    %1116 = vdwg.mxu0
    %v1119 = vunpack.c.l.b16 %v1023
    %v1120 = vunpack.c.l.b16 %v1024
    %v1121 = vpack.c.b16 %v1120, %v1119
    %v1124 = vunpack.c.l.b16 %v1031
    %v1125 = vunpack.c.l.b16 %v1032
    %v1126 = vpack.c.b16 %v1125, %v1124
    %v1129 = vsel %vm258, %v1121, 0
    %1131 = vmatpush.bf16.msra.mxu0 0
    %1132 = vmatpush.bf16.msra.mxu0 0
    %1133 = vmatpush.bf16.msra.mxu0 0
    %1134 = vmatpush.bf16.msra.mxu0 0
    %1135 = vmatpush.bf16.msra.mxu0 0
    %1136 = vmatpush.bf16.msra.mxu0 0
    %1137 = vmatpush.bf16.msra.mxu0 0
    %1138 = vmatpush.bf16.msra.mxu0 %v1126
    %1139 = vmatmul.bf16.gmra.mxu0 %v1129
    %v1140 = vpop.f32.mrf.mxu0
    %v1141 = vadd.f32 0.0, %v1140
    %v1142 = vpop.f32.mrf.mxu0
    %v1143 = vadd.f32 0.0, %v1142
    %1144 = vdwg.mxu0
    %v1145 = vsel %vm68, %v1057, 0.0
    %v1146 = vsel %vm68, %v1085, 0.0
    %v1147 = vadd.f32 %v1145, %v1146
    %v1148 = vsel %vm68, %v1113, 0.0
    %v1149 = vadd.f32 %v1147, %v1148
    %v1150 = vsel %vm68, %v1141, 0.0
    %v1151 = vadd.f32 %v1149, %v1150
    %v1152 = vsel %vm68, %v1059, 0.0
    %v1153 = vsel %vm68, %v1087, 0.0
    %v1154 = vadd.f32 %v1152, %v1153
    %v1155 = vsel %vm68, %v1115, 0.0
    %v1156 = vadd.f32 %v1154, %v1155
    %v1157 = vsel %vm68, %v1143, 0.0
    %v1158 = vadd.f32 %v1156, %v1157
    %1159 = vst.msk [vmem:[#allocation8] sm:$0xff] %vm68, %v1151
    %1160 = vst.msk [vmem:[#allocation8 + $0x8] sm:$0xff] %vm68, %v1158
    // Predicated region
    $region30: #{tpu_custom_call.1} parent=1 // pred_check
      _
    $region31: #{tpu_custom_call.1} parent=1 // pred_check_branch
      %1162 = sbr.rel (0) target = $region33
    $region32: #{tpu_custom_call.1} parent=1 // pred_region
      %1164 = vsyncadd [#allocation4], 0
      %s1165 = sshll.u32 [#allocation8], 4
      %s1166 = int_to_ptr.vmem [resolvable:$true] %s1165
      %s1167 = sshll.u32 %s4, 4
      %s1168 = int_to_ptr.hbm [resolvable:$true] %s1167
      %1173 = dma.vmem_to_hbm [thread:$0]  %s1166, 256, %s1168, [#allocation4], 128, 128, 8
    $region33: #{tpu_custom_call.1} parent=1 // pred_fallthru
      _
    // Predicated region
    $region34: #{tpu_custom_call.1} parent=1 // pred_check
      _
    $region35: #{tpu_custom_call.1} parent=1 // pred_check_branch
      %1175 = sbr.rel (0) target = $region37
    $region36: #{tpu_custom_call.1} parent=1 // pred_region
      %1177 = dma.done [#allocation4], 256
    $region37: #{tpu_custom_call.1} parent=1 // pred_fallthru
      _
    %1178 = vsyncpa [#allocation3], 1
    %1179 = vsyncpa [#allocation6], 1
    %1180 = vsyncpa [#allocation4], 1

</llo_original>
